<compile_context>
chip_gen: v5e
topology: v5e:2x2
jax: 0.10.0
libtpu: 0.0.40
codegen_flags: <defaults>
</compile_context>

<pallas_src>
import numpy as np

import jax
import jax.numpy as jnp
from jax.experimental import pallas as pl
from jax.experimental.pallas import tpu as pltpu


LANE = 128                                # feature dims padded to lane width
RESIDENT_H_BUDGET = 8 * 1024 * 1024       # keep agg input resident below this
TILED_VMEM_LIMIT = 32 * 1024 * 1024       # scoped VMEM request, tiled-path calls
FUSED_VMEM_FRACTION = 0.7                 # fraction of physical VMEM for fused path


def _round_up(x, m):
    return (x + m - 1) // m * m


def _vmem_capacity_bytes():
    try:
        return int(pltpu.get_tpu_info().vmem_capacity_bytes)
    except Exception:
        return 64 * 1024 * 1024           # conservative fallback (v7x per-TC VMEM)


def _pad2(a, shape, dtype):
    """Cast to `dtype` and zero-pad a 2D array to `shape` (skip pad if aligned)."""
    a = a.astype(dtype)
    if a.shape == tuple(shape):
        return a                          # avoid an extra HBM round trip
    out = jnp.zeros(shape, dtype)
    return out.at[: a.shape[0], : a.shape[1]].set(a)


def _itemsize(dtype):
    return np.dtype(dtype).itemsize


# ----------------------------------------------------------------------------
# Kernel 1: fused 4-layer GCN, single block (small N -- everything in VMEM,
# adj is read from HBM exactly once).
# TODO(synk): on v7x a 2-way row-split "parallel" grid on the final
# aggregation would use both TensorCores; currently v7x simply falls back to
# the tiled path sooner via its smaller VMEM-derived budget.
# ----------------------------------------------------------------------------
def gcn_fused_kernel(x_ref, adj_ref,
                     w1_ref, b1_ref, w2_ref, b2_ref,
                     w3_ref, b3_ref, w4_ref, b4_ref,
                     o_ref):
    adj = adj_ref[...]                    # bf16 (Np, Np)
    h = x_ref[...]                        # bf16 (Np, F0p)
    layers = ((w1_ref, b1_ref), (w2_ref, b2_ref),
              (w3_ref, b3_ref), (w4_ref, b4_ref))
    for idx, (w_ref, b_ref) in enumerate(layers):
        hlin = jnp.dot(h, w_ref[...],
                       preferred_element_type=jnp.float32) + b_ref[...]
        agg = jnp.dot(adj, hlin.astype(jnp.bfloat16),
                      preferred_element_type=jnp.float32)
        h = agg if idx == len(layers) - 1 else agg.astype(jnp.bfloat16)
    o_ref[...] = h.astype(o_ref.dtype)


def _gcn_fused(x_p, adj_p, ws, bs, vmem_limit):
    n_pad = adj_p.shape[0]
    f_last = ws[-1].shape[1]
    args = (x_p, adj_p, ws[0], bs[0], ws[1], bs[1], ws[2], bs[2], ws[3], bs[3])

    flops = 0
    bytes_accessed = x_p.size * 2 + adj_p.size * 2 + n_pad * f_last * 4
    fin = x_p.shape[1]
    for w, b in zip(ws, bs):
        fout = w.shape[1]
        flops += 2 * n_pad * fin * fout + 2 * n_pad * n_pad * fout
        bytes_accessed += w.size * 2 + b.size * 4
        fin = fout

    # No grid / specs: every operand is a full array resident in VMEM.
    return pl.pallas_call(
        gcn_fused_kernel,
        out_shape=jax.ShapeDtypeStruct((n_pad, f_last), jnp.float32),
        compiler_params=pltpu.CompilerParams(vmem_limit_bytes=int(vmem_limit)),
        cost_estimate=pl.CostEstimate(flops=int(flops), transcendentals=0,
                                      bytes_accessed=int(bytes_accessed)),
    )(*args)


# ----------------------------------------------------------------------------
# Tiled path building blocks (large N).
# ----------------------------------------------------------------------------
def _tiled_layout(n):
    """Row padding plus (row tile, adj contraction tile) for the tiled path."""
    tm = 512 if n >= 1024 else 256
    n_pad = _round_up(n, tm)
    tk = 256
    for cand in (2048, 1024, 512, 256):
        if n_pad % cand == 0:
            tk = cand
            break
    return n_pad, tm, tk


def _agg_tile_sizes(n_pad):
    tm = 512 if (n_pad % 512 == 0 and n_pad >= 1024) else 256
    tk = 256
    for cand in (2048, 1024, 512, 256):
        if n_pad % cand == 0:
            tk = cand
            break
    return tm, tk


# --- aggregation: out = adj @ h, streaming adj (tm, tk) tiles -----------------
def _make_agg_resident_kernel(tk):
    # h is fully resident in VMEM (constant index_map); slice the k-th chunk.
    def kernel(adj_ref, h_ref, o_ref, acc_ref):
        k = pl.program_id(1)

        @pl.when(k == 0)
        def _():
            acc_ref[...] = jnp.zeros_like(acc_ref)

        off = pl.multiple_of(k * tk, tk)
        acc_ref[...] += jnp.dot(adj_ref[...], h_ref[pl.ds(off, tk), :],
                                preferred_element_type=jnp.float32)

        @pl.when(k == pl.num_programs(1) - 1)
        def _():
            o_ref[...] = acc_ref[...].astype(o_ref.dtype)

    return kernel


def _agg_streamed_kernel(adj_ref, h_ref, o_ref, acc_ref):
    k = pl.program_id(1)

    @pl.when(k == 0)
    def _():
        acc_ref[...] = jnp.zeros_like(acc_ref)

    acc_ref[...] += jnp.dot(adj_ref[...], h_ref[...],
                            preferred_element_type=jnp.float32)

    @pl.when(k == pl.num_programs(1) - 1)
    def _():
        o_ref[...] = acc_ref[...].astype(o_ref.dtype)


def _aggregate(adj_p, h, out_dtype, *, resident_h_budget=RESIDENT_H_BUDGET):
    n_pad = adj_p.shape[0]
    f = h.shape[1]
    tm, tk = _agg_tile_sizes(n_pad)
    grid = (n_pad // tm, n_pad // tk)

    h_bytes = h.size * _itemsize(h.dtype)
    resident = h_bytes <= resident_h_budget
    if resident:
        kernel = _make_agg_resident_kernel(tk)
        h_spec = pl.BlockSpec((n_pad, f), lambda i, k: (0, 0))   # DMA'd once
        h_traffic = h_bytes
    else:
        kernel = _agg_streamed_kernel
        h_spec = pl.BlockSpec((tk, f), lambda i, k: (k, 0))
        h_traffic = h_bytes * grid[0]
    # TODO(synk): if DMA is still exposed at large tk, adj spec could use
    # pipeline_mode=pl.Buffered(3); default double-buffering is kept here.

    bytes_accessed = (adj_p.size * _itemsize(adj_p.dtype) + h_traffic
                      + n_pad * f * _itemsize(out_dtype))
    cost = pl.CostEstimate(flops=int(2 * n_pad * n_pad * f), transcendentals=0,
                           bytes_accessed=int(bytes_accessed))

    return pl.pallas_call(
        kernel,
        out_shape=jax.ShapeDtypeStruct((n_pad, f), out_dtype),
        grid_spec=pltpu.PrefetchScalarGridSpec(
            num_scalar_prefetch=0,
            grid=grid,
            in_specs=[pl.BlockSpec((tm, tk), lambda i, k: (i, k)), h_spec],
            out_specs=pl.BlockSpec((tm, f), lambda i, k: (i, 0)),
            scratch_shapes=[pltpu.VMEM((tm, f), jnp.float32)]),
        compiler_params=pltpu.CompilerParams(
            dimension_semantics=("parallel", "arbitrary"),
            vmem_limit_bytes=TILED_VMEM_LIMIT),
        cost_estimate=cost,
    )(adj_p, h)


# --- linear transform: out = h @ W + b (optionally rowscale * b) --------------
def _lin_kernel(h_ref, w_ref, b_ref, o_ref):
    o_ref[...] = (jnp.dot(h_ref[...], w_ref[...],
                          preferred_element_type=jnp.float32)
                  + b_ref[...]).astype(o_ref.dtype)


def _lin_rowscale_kernel(h_ref, w_ref, b_ref, s_ref, o_ref):
    # Bias scaled per row by the adjacency row-sum; used when aggregation
    # happened first:  adj @ (hW + 1b) == (adj @ h) @ W + rowsum(adj) * b.
    o_ref[...] = (jnp.dot(h_ref[...], w_ref[...],
                          preferred_element_type=jnp.float32)
                  + s_ref[...] * b_ref[...]).astype(o_ref.dtype)


def _linear(h, w, b, out_dtype, rowscale=None):
    n_pad, fin = h.shape
    fout = w.shape[1]
    tm = 512 if n_pad % 512 == 0 else 256
    grid = (n_pad // tm,)

    in_specs = [pl.BlockSpec((tm, fin), lambda i: (i, 0)),
                pl.BlockSpec((fin, fout), lambda i: (0, 0)),
                pl.BlockSpec((1, fout), lambda i: (0, 0))]
    args = [h, w, b]
    kernel = _lin_kernel
    if rowscale is not None:
        in_specs.append(pl.BlockSpec((tm, 1), lambda i: (i, 0)))
        args.append(rowscale)
        kernel = _lin_rowscale_kernel

    bytes_accessed = (h.size * _itemsize(h.dtype) + w.size * _itemsize(w.dtype)
                      + b.size * 4 + n_pad * fout * _itemsize(out_dtype))
    cost = pl.CostEstimate(flops=int(2 * n_pad * fin * fout), transcendentals=0,
                           bytes_accessed=int(bytes_accessed))

    return pl.pallas_call(
        kernel,
        out_shape=jax.ShapeDtypeStruct((n_pad, fout), out_dtype),
        grid_spec=pltpu.PrefetchScalarGridSpec(
            num_scalar_prefetch=0,
            grid=grid,
            in_specs=in_specs,
            out_specs=pl.BlockSpec((tm, fout), lambda i: (i, 0))),
        compiler_params=pltpu.CompilerParams(
            dimension_semantics=("parallel",),
            vmem_limit_bytes=TILED_VMEM_LIMIT),
        cost_estimate=cost,
    )(*args)


def _gcn_tiled(x_p, adj_p, ws, bs, *, resident_h_budget=RESIDENT_H_BUDGET):
    rowsum = None
    h = x_p
    n_layers = len(ws)
    for li, (w, b) in enumerate(zip(ws, bs)):
        fin, fout = w.shape                      # padded dims decide the order
        out_dt = jnp.float32 if li == n_layers - 1 else jnp.bfloat16
        if fin < fout:
            # Aggregate-first: the N^2 matmul / streamed intermediate use fin.
            if rowsum is None:
                rowsum = jnp.sum(adj_p.astype(jnp.float32), axis=1,
                                 keepdims=True)
            agg = _aggregate(adj_p, h, jnp.bfloat16,
                             resident_h_budget=resident_h_budget)
            h = _linear(agg, w, b, out_dt, rowscale=rowsum)
        else:
            # Linear-first: hlin computed exactly once per layer (not per tile).
            hlin = _linear(h, w, b, jnp.bfloat16)
            h = _aggregate(adj_p, hlin, out_dt,
                           resident_h_budget=resident_h_budget)
    return h


# ----------------------------------------------------------------------------
# Wrapper: padding / dtype prep / path selection / output slicing.
# ----------------------------------------------------------------------------
def gcn_forward(x, adj, params, *, force_tiled=False,
                resident_h_budget=RESIDENT_H_BUDGET):
    N, f0 = x.shape
    dims = [params["w1"].shape[0], params["w1"].shape[1],
            params["w2"].shape[1], params["w3"].shape[1],
            params["w4"].shape[1]]
    assert dims[0] == f0
    dims_p = [_round_up(d, LANE) for d in dims]
    f_out = dims[-1]

    # Generation-aware fused budget (v5e/v6e: ~90 MiB, v7x: ~45 MiB).
    fused_budget = int(_vmem_capacity_bytes() * FUSED_VMEM_FRACTION)

    n_pad_fused = _round_up(N, LANE)
    max_f = max(dims_p)
    fused_bytes = (n_pad_fused * n_pad_fused * 2            # adj  (bf16)
                   + n_pad_fused * dims_p[0] * 2            # x    (bf16)
                   + n_pad_fused * dims_p[-1] * 4           # out  (f32)
                   + sum(dims_p[i] * dims_p[i + 1] * 2 + dims_p[i + 1] * 4
                         for i in range(4))                 # weights + biases
                   + 12 * n_pad_fused * max_f)              # live temporaries
    use_fused = (not force_tiled) and fused_bytes <= fused_budget

    n_pad = n_pad_fused if use_fused else _tiled_layout(N)[0]

    # TODO(synk): adj is still read as f32 and re-written as bf16 here; produce
    # adj in bf16 upstream (or fp8 on v7x, accuracy-gated) to save this pass.
    x_p = _pad2(x, (n_pad, dims_p[0]), jnp.bfloat16)
    adj_p = _pad2(adj, (n_pad, n_pad), jnp.bfloat16)
    ws, bs = [], []
    for i in range(4):
        ws.append(_pad2(params[f"w{i + 1}"],
                        (dims_p[i], dims_p[i + 1]), jnp.bfloat16))
        bs.append(_pad2(params[f"b{i + 1}"].reshape(1, -1),
                        (1, dims_p[i + 1]), jnp.float32))

    if use_fused:
        out_p = _gcn_fused(x_p, adj_p, ws, bs, fused_budget)
    else:
        out_p = _gcn_tiled(x_p, adj_p, ws, bs,
                           resident_h_budget=resident_h_budget)
    return out_p[:N, :f_out]


# ----------------------------------------------------------------------------
# Parameters (kaiming-normal weights like _initialize_weights, Linear-style
# uniform biases) and JAX references.
# ----------------------------------------------------------------------------
def make_params(key, in_dim, out_dim):
    dims = [in_dim, in_dim * 2, in_dim * 4, in_dim * 2, out_dim]
    params = {}
    keys = jax.random.split(key, 8)
    for i in range(4):
        fin, fout = dims[i], dims[i + 1]
        std = (2.0 / fin) ** 0.5                       # kaiming_normal_ (fan_in)
        w = std * jax.random.normal(keys[2 * i], (fin, fout), dtype=jnp.float32)
        bound = 1.0 / (fin ** 0.5)                     # nn.Linear default bias
        b = jax.random.uniform(keys[2 * i + 1], (1, fout), jnp.float32,
                               -bound, bound)
        params[f"w{i + 1}"] = w
        params[f"b{i + 1}"] = b
    # TODO(synk): self.ln (LayerNorm) is constructed in __init__ but never used
    # in forward(); intentionally not implemented.
    return params


def gcn_reference_f32(x, adj, params):
    h = x
    for i in range(1, 5):
        h = h @ params[f"w{i}"] + params[f"b{i}"]
        h = adj @ h
    return h


def gcn_reference_bf16(x, adj, params):
    """Mirrors the kernel numerics on the linear-first path (bf16 operands,
    f32 accumulate/bias)."""
    bf = jnp.bfloat16
    adj_b = adj.astype(bf)
    h = x.astype(bf)
    for i in range(1, 5):
        hlin = jnp.dot(h, params[f"w{i}"].astype(bf),
                       preferred_element_type=jnp.float32) + params[f"b{i}"]
        h = jnp.dot(adj_b, hlin.astype(bf), preferred_element_type=jnp.float32)
        if i < 4:
            h = h.astype(bf)
    return h


def _make_adj(key, n):
    a = jax.random.uniform(key, (n, n), dtype=jnp.float32)
    a = (a + a.T) * 0.5 + jnp.eye(n, dtype=jnp.float32)
    return a / jnp.sum(a, axis=1, keepdims=True)


if __name__ == "__main__":
    key = jax.random.PRNGKey(0)
    k_x, k_adj, k_p, k_x2, k_adj2, k_x3, k_p3 = jax.random.split(key, 7)

    # --- small shapes: fused single-block path ---
    N, in_dim, out_dim = 16, 8, 8
    x = jax.random.normal(k_x, (N, in_dim), dtype=jnp.float32)
    adj = _make_adj(k_adj, N)
    params = make_params(k_p, in_dim, out_dim)

    out = jax.block_until_ready(gcn_forward(x, adj, params))
    assert out.shape == (N, out_dim)
    ref_q = gcn_reference_bf16(x, adj, params)
    ref_f = gcn_reference_f32(x, adj, params)
    assert jnp.allclose(out, ref_q, atol=1e-2, rtol=1e-2), \
        "mismatch vs bf16-matched reference (fused path)"
    assert jnp.allclose(out, ref_f, atol=1e-1, rtol=1e-1), \
        "mismatch vs f32 reference (fused path)"

    # --- larger N: tiled path, linear-first order, resident agg input ---
    N2 = 300
    x2 = jax.random.normal(k_x2, (N2, in_dim), dtype=jnp.float32)
    adj2 = _make_adj(k_adj2, N2)
    out2 = jax.block_until_ready(gcn_forward(x2, adj2, params,
                                             force_tiled=True))
    assert out2.shape == (N2, out_dim)
    ref2_q = gcn_reference_bf16(x2, adj2, params)
    assert jnp.allclose(out2, ref2_q, atol=1e-2, rtol=1e-2), \
        "mismatch vs bf16-matched reference (tiled path)"

    # --- wider features: exercises aggregate-first order (fin<fout layers),
    #     rowsum-scaled bias, and the streamed (non-resident) agg input path ---
    in_dim3 = 96
    x3 = jax.random.normal(k_x3, (N2, in_dim3), dtype=jnp.float32)
    params3 = make_params(k_p3, in_dim3, in_dim3)
    out3 = jax.block_until_ready(
        gcn_forward(x3, adj2, params3, force_tiled=True, resident_h_budget=0))
    assert out3.shape == (N2, in_dim3)
    ref3 = gcn_reference_f32(x3, adj2, params3)
    err = float(jnp.max(jnp.abs(out3 - ref3))
                / jnp.maximum(1.0, jnp.max(jnp.abs(ref3))))
    assert err < 2e-2, \
        f"mismatch vs f32 reference (mixed-order tiled path): {err}"

    print("KERNEL_OK")
</pallas_src>

<mosaic_0001>
module attributes {stable_mosaic.version = 11 : i64} {
  func.func @gcn_fused_kernel(%arg0: memref<128x128xbf16, #tpu.memory_space<vmem>>, %arg1: memref<128x128xbf16, #tpu.memory_space<vmem>>, %arg2: memref<128x128xbf16, #tpu.memory_space<vmem>>, %arg3: memref<1x128xf32, #tpu.memory_space<vmem>>, %arg4: memref<128x128xbf16, #tpu.memory_space<vmem>>, %arg5: memref<1x128xf32, #tpu.memory_space<vmem>>, %arg6: memref<128x128xbf16, #tpu.memory_space<vmem>>, %arg7: memref<1x128xf32, #tpu.memory_space<vmem>>, %arg8: memref<128x128xbf16, #tpu.memory_space<vmem>>, %arg9: memref<1x128xf32, #tpu.memory_space<vmem>>, %arg10: memref<128x128xf32, #tpu.memory_space<vmem>>) attributes {dimension_semantics = [], scalar_prefetch = 0 : i64, scratch_operands = 0 : i64, tpu.core_type = #tpu.core_type<tc>} {
    %c0 = arith.constant 0 : index
    %c0_0 = arith.constant 0 : index
    %0 = vector.load %arg1[%c0, %c0_0] : memref<128x128xbf16, #tpu.memory_space<vmem>>, vector<128x128xbf16>
    %c0_1 = arith.constant 0 : index
    %c0_2 = arith.constant 0 : index
    %1 = vector.load %arg0[%c0_1, %c0_2] : memref<128x128xbf16, #tpu.memory_space<vmem>>, vector<128x128xbf16>
    %c0_3 = arith.constant 0 : index
    %c0_4 = arith.constant 0 : index
    %2 = vector.load %arg2[%c0_3, %c0_4] : memref<128x128xbf16, #tpu.memory_space<vmem>>, vector<128x128xbf16>
    %cst = arith.constant dense<0.000000e+00> : vector<128x128xf32>
    %3 = tpu.matmul %1, %2, %cst {dimension_numbers = #tpu.dot_dimension_numbers<[1], [0], [0], [1], [0, 0, 1, 1], [], []>} : vector<128x128xbf16>, vector<128x128xbf16>, vector<128x128xf32> -> vector<128x128xf32>
    %c0_5 = arith.constant 0 : index
    %c0_6 = arith.constant 0 : index
    %4 = vector.load %arg3[%c0_5, %c0_6] : memref<1x128xf32, #tpu.memory_space<vmem>>, vector<1x128xf32>
    %5 = vector.broadcast %4 : vector<1x128xf32> to vector<128x128xf32>
    %6 = arith.addf %3, %5 : vector<128x128xf32>
    %7 = arith.truncf %6 : vector<128x128xf32> to vector<128x128xbf16>
    %cst_7 = arith.constant dense<0.000000e+00> : vector<128x128xf32>
    %8 = tpu.matmul %0, %7, %cst_7 {dimension_numbers = #tpu.dot_dimension_numbers<[1], [0], [0], [1], [0, 0, 1, 1], [], []>} : vector<128x128xbf16>, vector<128x128xbf16>, vector<128x128xf32> -> vector<128x128xf32>
    %9 = arith.truncf %8 : vector<128x128xf32> to vector<128x128xbf16>
    %c0_8 = arith.constant 0 : index
    %c0_9 = arith.constant 0 : index
    %10 = vector.load %arg4[%c0_8, %c0_9] : memref<128x128xbf16, #tpu.memory_space<vmem>>, vector<128x128xbf16>
    %cst_10 = arith.constant dense<0.000000e+00> : vector<128x128xf32>
    %11 = tpu.matmul %9, %10, %cst_10 {dimension_numbers = #tpu.dot_dimension_numbers<[1], [0], [0], [1], [0, 0, 1, 1], [], []>} : vector<128x128xbf16>, vector<128x128xbf16>, vector<128x128xf32> -> vector<128x128xf32>
    %c0_11 = arith.constant 0 : index
    %c0_12 = arith.constant 0 : index
    %12 = vector.load %arg5[%c0_11, %c0_12] : memref<1x128xf32, #tpu.memory_space<vmem>>, vector<1x128xf32>
    %13 = vector.broadcast %12 : vector<1x128xf32> to vector<128x128xf32>
    %14 = arith.addf %11, %13 : vector<128x128xf32>
    %15 = arith.truncf %14 : vector<128x128xf32> to vector<128x128xbf16>
    %cst_13 = arith.constant dense<0.000000e+00> : vector<128x128xf32>
    %16 = tpu.matmul %0, %15, %cst_13 {dimension_numbers = #tpu.dot_dimension_numbers<[1], [0], [0], [1], [0, 0, 1, 1], [], []>} : vector<128x128xbf16>, vector<128x128xbf16>, vector<128x128xf32> -> vector<128x128xf32>
    %17 = arith.truncf %16 : vector<128x128xf32> to vector<128x128xbf16>
    %c0_14 = arith.constant 0 : index
    %c0_15 = arith.constant 0 : index
    %18 = vector.load %arg6[%c0_14, %c0_15] : memref<128x128xbf16, #tpu.memory_space<vmem>>, vector<128x128xbf16>
    %cst_16 = arith.constant dense<0.000000e+00> : vector<128x128xf32>
    %19 = tpu.matmul %17, %18, %cst_16 {dimension_numbers = #tpu.dot_dimension_numbers<[1], [0], [0], [1], [0, 0, 1, 1], [], []>} : vector<128x128xbf16>, vector<128x128xbf16>, vector<128x128xf32> -> vector<128x128xf32>
    %c0_17 = arith.constant 0 : index
    %c0_18 = arith.constant 0 : index
    %20 = vector.load %arg7[%c0_17, %c0_18] : memref<1x128xf32, #tpu.memory_space<vmem>>, vector<1x128xf32>
    %21 = vector.broadcast %20 : vector<1x128xf32> to vector<128x128xf32>
    %22 = arith.addf %19, %21 : vector<128x128xf32>
    %23 = arith.truncf %22 : vector<128x128xf32> to vector<128x128xbf16>
    %cst_19 = arith.constant dense<0.000000e+00> : vector<128x128xf32>
    %24 = tpu.matmul %0, %23, %cst_19 {dimension_numbers = #tpu.dot_dimension_numbers<[1], [0], [0], [1], [0, 0, 1, 1], [], []>} : vector<128x128xbf16>, vector<128x128xbf16>, vector<128x128xf32> -> vector<128x128xf32>
    %25 = arith.truncf %24 : vector<128x128xf32> to vector<128x128xbf16>
    %c0_20 = arith.constant 0 : index
    %c0_21 = arith.constant 0 : index
    %26 = vector.load %arg8[%c0_20, %c0_21] : memref<128x128xbf16, #tpu.memory_space<vmem>>, vector<128x128xbf16>
    %cst_22 = arith.constant dense<0.000000e+00> : vector<128x128xf32>
    %27 = tpu.matmul %25, %26, %cst_22 {dimension_numbers = #tpu.dot_dimension_numbers<[1], [0], [0], [1], [0, 0, 1, 1], [], []>} : vector<128x128xbf16>, vector<128x128xbf16>, vector<128x128xf32> -> vector<128x128xf32>
    %c0_23 = arith.constant 0 : index
    %c0_24 = arith.constant 0 : index
    %28 = vector.load %arg9[%c0_23, %c0_24] : memref<1x128xf32, #tpu.memory_space<vmem>>, vector<1x128xf32>
    %29 = vector.broadcast %28 : vector<1x128xf32> to vector<128x128xf32>
    %30 = arith.addf %27, %29 : vector<128x128xf32>
    %31 = arith.truncf %30 : vector<128x128xf32> to vector<128x128xbf16>
    %cst_25 = arith.constant dense<0.000000e+00> : vector<128x128xf32>
    %32 = tpu.matmul %0, %31, %cst_25 {dimension_numbers = #tpu.dot_dimension_numbers<[1], [0], [0], [1], [0, 0, 1, 1], [], []>} : vector<128x128xbf16>, vector<128x128xbf16>, vector<128x128xf32> -> vector<128x128xf32>
    %c0_26 = arith.constant 0 : index
    %c0_27 = arith.constant 0 : index
    %33 = vector.load %arg10[%c0_26, %c0_27] : memref<128x128xf32, #tpu.memory_space<vmem>>, vector<128x128xf32>
    tpu.vector_store %arg10[%c0_26, %c0_27], %32 {strides = array<i32>} : memref<128x128xf32, #tpu.memory_space<vmem>>, vector<128x128xf32>,
    return
  }
}

</mosaic_0001>

<llo_original>
// kernel: tpu_custom_call.1
$region0: #{tpu_custom_call.1}
  #allocation0 [shape = 'u32[]', space=smem, size = 0x4, offset = 0x4, fixed_abs, tag = 'smem constant byte address 0x4 - core index']
  #allocation1 [shape = 'u32[72,128]{1,0:T(1,128)}', space=vmem, size = 0x9000, scoped, tag = 'internal scratch']
  %s0 = inlined_call_operand.hbm [shape: bf16[128,128], index: 0, kind: input, shape index: {}]
  %s1 = inlined_call_operand.hbm [shape: bf16[128,128], index: 1, kind: input, shape index: {}]
  %s2 = inlined_call_operand.hbm [shape: bf16[128,128], index: 2, kind: input, shape index: {}]
  %s3 = inlined_call_operand.vmem [shape: f32[1,128], index: 3, kind: input, shape index: {}]
  %s4 = inlined_call_operand.hbm [shape: bf16[128,128], index: 4, kind: input, shape index: {}]
  %s5 = inlined_call_operand.vmem [shape: f32[1,128], index: 5, kind: input, shape index: {}]
  %s6 = inlined_call_operand.hbm [shape: bf16[128,128], index: 6, kind: input, shape index: {}]
  %s7 = inlined_call_operand.vmem [shape: f32[1,128], index: 7, kind: input, shape index: {}]
  %s8 = inlined_call_operand.hbm [shape: bf16[128,128], index: 8, kind: input, shape index: {}]
  %s9 = inlined_call_operand.vmem [shape: f32[1,128], index: 9, kind: input, shape index: {}]
  %s10 = inlined_call_operand.hbm [shape: f32[128,128], index: 10, kind: output, shape index: {}]
  %s11 = sld [smem:[#allocation0]]
  $region74: #{tpu_custom_call.1} parent=0
    _
  %s13 = ssub.s32 1, %s11
  %s14 = scalar_select 0, %s13, %s11
  $region1: #{tpu_custom_call.1} parent=0
    #allocation2 [shape = 'u8[32768]{0}', space=vmem, size = 0x8000, scoped, tag = 'input window, operand 0, single buffered']
    #allocation3 [shape = 's32[1]{0}', space=sflag, size = 0x4, scoped, tag = 'scoped memory for tpu_custom_call.1']
    #allocation4 [shape = 's32[1]{0}', space=sflag, size = 0x4, scoped, tag = 'scoped memory for tpu_custom_call.1']
    #allocation5 [shape = 'u8[32768]{0}', space=vmem, size = 0x8000, scoped, tag = 'input window, operand 1, single buffered']
    #allocation6 [shape = 's32[1]{0}', space=sflag, size = 0x4, scoped, tag = 'scoped memory for tpu_custom_call.1']
    #allocation7 [shape = 'u8[32768]{0}', space=vmem, size = 0x8000, scoped, tag = 'input window, operand 2, single buffered']
    #allocation8 [shape = 'u8[32768]{0}', space=vmem, size = 0x8000, scoped, tag = 'input window, operand 4, single buffered']
    #allocation9 [shape = 's32[1]{0}', space=sflag, size = 0x4, scoped, tag = 'scoped memory for tpu_custom_call.1']
    #allocation10 [shape = 'u8[32768]{0}', space=vmem, size = 0x8000, scoped, tag = 'input window, operand 6, single buffered']
    #allocation11 [shape = 'u8[32768]{0}', space=vmem, size = 0x8000, scoped, tag = 'input window, operand 8, single buffered']
    #allocation12 [shape = 's32[1]{0}', space=sflag, size = 0x4, scoped, tag = 'scoped memory for tpu_custom_call.1']
    #allocation13 [shape = 'u8[65536]{0}', space=vmem, size = 0x10000, scoped, tag = 'output window, operand 0, single buffered']
    %15 = vsyncpa [#allocation3], 0
    %16 = vsyncpa [#allocation6], 0
    %17 = vsyncpa [#allocation9], 0
    %18 = vsyncpa [#allocation12], 0
    %19 = vsyncpa [#allocation4], 0
    // Predicated region
    $region2: #{tpu_custom_call.1} parent=1 // pred_check
      _
    $region3: #{tpu_custom_call.1} parent=1 // pred_check_branch
      %21 = sbr.rel (0) target = $region5
    $region4: #{tpu_custom_call.1} parent=1 // pred_region
      %23 = vsyncadd [#allocation3], 0
      %s24 = sshll.u32 %s0, 4
      %s25 = int_to_ptr.hbm [resolvable:$true] %s24
      %s26 = sshll.u32 [#allocation2], 4
      %s27 = int_to_ptr.vmem [resolvable:$true] %s26
      %32 = dma.hbm_to_vmem [thread:$0]  %s25, 1024, %s27, [#allocation3], 64, 64, 4
    $region5: #{tpu_custom_call.1} parent=1 // pred_fallthru
      _
    // Predicated region
    $region6: #{tpu_custom_call.1} parent=1 // pred_check
      _
    $region7: #{tpu_custom_call.1} parent=1 // pred_check_branch
      %34 = sbr.rel (0) target = $region9
    $region8: #{tpu_custom_call.1} parent=1 // pred_region
      %36 = vsyncadd [#allocation6], 0
      %s37 = sshll.u32 %s1, 4
      %s38 = int_to_ptr.hbm [resolvable:$true] %s37
      %s39 = sshll.u32 [#allocation5], 4
      %s40 = int_to_ptr.vmem [resolvable:$true] %s39
      %45 = dma.hbm_to_vmem [thread:$0]  %s38, 1024, %s40, [#allocation6], 64, 64, 4
    $region9: #{tpu_custom_call.1} parent=1 // pred_fallthru
      _
    // Predicated region
    $region10: #{tpu_custom_call.1} parent=1 // pred_check
      _
    $region11: #{tpu_custom_call.1} parent=1 // pred_check_branch
      %47 = sbr.rel (0) target = $region13
    $region12: #{tpu_custom_call.1} parent=1 // pred_region
      %49 = vsyncadd [#allocation6], 0
      %s50 = sshll.u32 %s2, 4
      %s51 = int_to_ptr.hbm [resolvable:$true] %s50
      %s52 = sshll.u32 [#allocation7], 4
      %s53 = int_to_ptr.vmem [resolvable:$true] %s52
      %58 = dma.hbm_to_vmem [thread:$0]  %s51, 1024, %s53, [#allocation6], 64, 64, 4
    $region13: #{tpu_custom_call.1} parent=1 // pred_fallthru
      _
    // Predicated region
    $region14: #{tpu_custom_call.1} parent=1 // pred_check
      _
    $region15: #{tpu_custom_call.1} parent=1 // pred_check_branch
      %60 = sbr.rel (0) target = $region17
    $region16: #{tpu_custom_call.1} parent=1 // pred_region
      _
    $region17: #{tpu_custom_call.1} parent=1 // pred_fallthru
      _
    // Predicated region
    $region18: #{tpu_custom_call.1} parent=1 // pred_check
      _
    $region19: #{tpu_custom_call.1} parent=1 // pred_check_branch
      %62 = sbr.rel (0) target = $region21
    $region20: #{tpu_custom_call.1} parent=1 // pred_region
      %64 = vsyncadd [#allocation9], 0
      %s65 = sshll.u32 %s4, 4
      %s66 = int_to_ptr.hbm [resolvable:$true] %s65
      %s67 = sshll.u32 [#allocation8], 4
      %s68 = int_to_ptr.vmem [resolvable:$true] %s67
      %73 = dma.hbm_to_vmem [thread:$0]  %s66, 1024, %s68, [#allocation9], 64, 64, 4
    $region21: #{tpu_custom_call.1} parent=1 // pred_fallthru
      _
    // Predicated region
    $region22: #{tpu_custom_call.1} parent=1 // pred_check
      _
    $region23: #{tpu_custom_call.1} parent=1 // pred_check_branch
      %75 = sbr.rel (0) target = $region25
    $region24: #{tpu_custom_call.1} parent=1 // pred_region
      _
    $region25: #{tpu_custom_call.1} parent=1 // pred_fallthru
      _
    // Predicated region
    $region26: #{tpu_custom_call.1} parent=1 // pred_check
      _
    $region27: #{tpu_custom_call.1} parent=1 // pred_check_branch
      %77 = sbr.rel (0) target = $region29
    $region28: #{tpu_custom_call.1} parent=1 // pred_region
      %79 = vsyncadd [#allocation9], 0
      %s80 = sshll.u32 %s6, 4
      %s81 = int_to_ptr.hbm [resolvable:$true] %s80
      %s82 = sshll.u32 [#allocation10], 4
      %s83 = int_to_ptr.vmem [resolvable:$true] %s82
      %88 = dma.hbm_to_vmem [thread:$0]  %s81, 1024, %s83, [#allocation9], 64, 64, 4
    $region29: #{tpu_custom_call.1} parent=1 // pred_fallthru
      _
    // Predicated region
    $region30: #{tpu_custom_call.1} parent=1 // pred_check
      _
    $region31: #{tpu_custom_call.1} parent=1 // pred_check_branch
      %90 = sbr.rel (0) target = $region33
    $region32: #{tpu_custom_call.1} parent=1 // pred_region
      _
    $region33: #{tpu_custom_call.1} parent=1 // pred_fallthru
      _
    // Predicated region
    $region34: #{tpu_custom_call.1} parent=1 // pred_check
      _
    $region35: #{tpu_custom_call.1} parent=1 // pred_check_branch
      %92 = sbr.rel (0) target = $region37
    $region36: #{tpu_custom_call.1} parent=1 // pred_region
      %94 = vsyncadd [#allocation12], 0
      %s95 = sshll.u32 %s8, 4
      %s96 = int_to_ptr.hbm [resolvable:$true] %s95
      %s97 = sshll.u32 [#allocation11], 4
      %s98 = int_to_ptr.vmem [resolvable:$true] %s97
      %103 = dma.hbm_to_vmem [thread:$0]  %s96, 1024, %s98, [#allocation12], 64, 64, 4
    $region37: #{tpu_custom_call.1} parent=1 // pred_fallthru
      _
    // Predicated region
    $region38: #{tpu_custom_call.1} parent=1 // pred_check
      _
    $region39: #{tpu_custom_call.1} parent=1 // pred_check_branch
      %105 = sbr.rel (0) target = $region41
    $region40: #{tpu_custom_call.1} parent=1 // pred_region
      _
    $region41: #{tpu_custom_call.1} parent=1 // pred_fallthru
      _
    // Predicated region
    $region42: #{tpu_custom_call.1} parent=1 // pred_check
      _
    $region43: #{tpu_custom_call.1} parent=1 // pred_check_branch
      %107 = sbr.rel (0) target = $region45
    $region44: #{tpu_custom_call.1} parent=1 // pred_region
      %109 = dma.done [#allocation3], 1024
    $region45: #{tpu_custom_call.1} parent=1 // pred_fallthru
      _
    // Predicated region
    $region46: #{tpu_custom_call.1} parent=1 // pred_check
      _
    $region47: #{tpu_custom_call.1} parent=1 // pred_check_branch
      %111 = sbr.rel (0) target = $region49
    $region48: #{tpu_custom_call.1} parent=1 // pred_region
      %113 = dma.done [#allocation6], 1024
    $region49: #{tpu_custom_call.1} parent=1 // pred_fallthru
      _
    // Predicated region
    $region50: #{tpu_custom_call.1} parent=1 // pred_check
      _
    $region51: #{tpu_custom_call.1} parent=1 // pred_check_branch
      %115 = sbr.rel (0) target = $region53
    $region52: #{tpu_custom_call.1} parent=1 // pred_region
      %117 = dma.done [#allocation6], 1024
    $region53: #{tpu_custom_call.1} parent=1 // pred_fallthru
      _
    // Predicated region
    $region54: #{tpu_custom_call.1} parent=1 // pred_check
      _
    $region55: #{tpu_custom_call.1} parent=1 // pred_check_branch
      %119 = sbr.rel (0) target = $region57
    $region56: #{tpu_custom_call.1} parent=1 // pred_region
      %121 = dma.done [#allocation9], 1024
    $region57: #{tpu_custom_call.1} parent=1 // pred_fallthru
      _
    // Predicated region
    $region58: #{tpu_custom_call.1} parent=1 // pred_check
      _
    $region59: #{tpu_custom_call.1} parent=1 // pred_check_branch
      %123 = sbr.rel (0) target = $region61
    $region60: #{tpu_custom_call.1} parent=1 // pred_region
      %125 = dma.done [#allocation9], 1024
    $region61: #{tpu_custom_call.1} parent=1 // pred_fallthru
      _
    // Predicated region
    $region62: #{tpu_custom_call.1} parent=1 // pred_check
      _
    $region63: #{tpu_custom_call.1} parent=1 // pred_check_branch
      %127 = sbr.rel (0) target = $region65
    $region64: #{tpu_custom_call.1} parent=1 // pred_region
      %129 = dma.done [#allocation12], 1024
    $region65: #{tpu_custom_call.1} parent=1 // pred_fallthru
      _
    %v130 = vld [vmem:[#allocation5] sm:$0xf]
    %v131 = vld [vmem:[#allocation5 + $0x4] sm:$0xf]
    %v132 = vld [vmem:[#allocation5 + $0x8] sm:$0xf]
    %v133 = vld [vmem:[#allocation5 + $0xc] sm:$0xf]
    %v134 = vld [vmem:[#allocation5 + $0x10] sm:$0xf]
    %v135 = vld [vmem:[#allocation5 + $0x14] sm:$0xf]
    %v136 = vld [vmem:[#allocation5 + $0x18] sm:$0xf]
    %v137 = vld [vmem:[#allocation5 + $0x1c] sm:$0xf]
    %v138 = vld [vmem:[#allocation5 + $0x20] sm:$0xf]
    %v139 = vld [vmem:[#allocation5 + $0x24] sm:$0xf]
    %v140 = vld [vmem:[#allocation5 + $0x28] sm:$0xf]
    %v141 = vld [vmem:[#allocation5 + $0x2c] sm:$0xf]
    %v142 = vld [vmem:[#allocation5 + $0x30] sm:$0xf]
    %v143 = vld [vmem:[#allocation5 + $0x34] sm:$0xf]
    %v144 = vld [vmem:[#allocation5 + $0x38] sm:$0xf]
    %v145 = vld [vmem:[#allocation5 + $0x3c] sm:$0xf]
    %v146 = vld [vmem:[#allocation2] sm:$0xf]
    %v147 = vld [vmem:[#allocation2 + $0x4] sm:$0xf]
    %v148 = vld [vmem:[#allocation2 + $0x8] sm:$0xf]
    %v149 = vld [vmem:[#allocation2 + $0xc] sm:$0xf]
    %v150 = vld [vmem:[#allocation2 + $0x10] sm:$0xf]
    %v151 = vld [vmem:[#allocation2 + $0x14] sm:$0xf]
    %v152 = vld [vmem:[#allocation2 + $0x18] sm:$0xf]
    %v153 = vld [vmem:[#allocation2 + $0x1c] sm:$0xf]
    %v154 = vld [vmem:[#allocation2 + $0x20] sm:$0xf]
    %v155 = vld [vmem:[#allocation2 + $0x24] sm:$0xf]
    %v156 = vld [vmem:[#allocation2 + $0x28] sm:$0xf]
    %v157 = vld [vmem:[#allocation2 + $0x2c] sm:$0xf]
    %v158 = vld [vmem:[#allocation2 + $0x30] sm:$0xf]
    %v159 = vld [vmem:[#allocation2 + $0x34] sm:$0xf]
    %v160 = vld [vmem:[#allocation2 + $0x38] sm:$0xf]
    %v161 = vld [vmem:[#allocation2 + $0x3c] sm:$0xf]
    %v162 = vld [vmem:[#allocation7] sm:$0xf]
    %v163 = vld [vmem:[#allocation7 + $0x4] sm:$0xf]
    %v164 = vld [vmem:[#allocation7 + $0x8] sm:$0xf]
    %v165 = vld [vmem:[#allocation7 + $0xc] sm:$0xf]
    %v166 = vld [vmem:[#allocation7 + $0x10] sm:$0xf]
    %v167 = vld [vmem:[#allocation7 + $0x14] sm:$0xf]
    %v168 = vld [vmem:[#allocation7 + $0x18] sm:$0xf]
    %v169 = vld [vmem:[#allocation7 + $0x1c] sm:$0xf]
    %v170 = vld [vmem:[#allocation7 + $0x20] sm:$0xf]
    %v171 = vld [vmem:[#allocation7 + $0x24] sm:$0xf]
    %v172 = vld [vmem:[#allocation7 + $0x28] sm:$0xf]
    %v173 = vld [vmem:[#allocation7 + $0x2c] sm:$0xf]
    %v174 = vld [vmem:[#allocation7 + $0x30] sm:$0xf]
    %v175 = vld [vmem:[#allocation7 + $0x34] sm:$0xf]
    %v176 = vld [vmem:[#allocation7 + $0x38] sm:$0xf]
    %v177 = vld [vmem:[#allocation7 + $0x3c] sm:$0xf]
    %v178 = vld [vmem:[%s3] sm:$0x1]
    %v180 = vperm.slane %v178, 0
    %v198 = vunpack.c.l.b16 %v146
    %v199 = vunpack.c.l.b16 %v147
    %v200 = vunpack.c.l.b16 %v148
    %v201 = vunpack.c.l.b16 %v149
    %v202 = vunpack.c.l.b16 %v150
    %v203 = vunpack.c.l.b16 %v151
    %v204 = vunpack.c.l.b16 %v152
    %v205 = vunpack.c.l.b16 %v153
    %v206 = vunpack.c.l.b16 %v154
    %v207 = vunpack.c.l.b16 %v155
    %v208 = vunpack.c.l.b16 %v156
    %v209 = vunpack.c.l.b16 %v157
    %v210 = vunpack.c.l.b16 %v158
    %v211 = vunpack.c.l.b16 %v159
    %v212 = vunpack.c.l.b16 %v160
    %v213 = vunpack.c.l.b16 %v161
    %v214 = vpack.c.b16 %v199, %v198
    %v215 = vpack.c.b16 %v201, %v200
    %v216 = vpack.c.b16 %v203, %v202
    %v217 = vpack.c.b16 %v205, %v204
    %v218 = vpack.c.b16 %v207, %v206
    %v219 = vpack.c.b16 %v209, %v208
    %v220 = vpack.c.b16 %v211, %v210
    %v221 = vpack.c.b16 %v213, %v212
    %v246 = vunpack.c.l.b16 %v162
    %v247 = vunpack.c.l.b16 %v163
    %v248 = vunpack.c.l.b16 %v164
    %v249 = vunpack.c.l.b16 %v165
    %v250 = vunpack.c.l.b16 %v166
    %v251 = vunpack.c.l.b16 %v167
    %v252 = vunpack.c.l.b16 %v168
    %v253 = vunpack.c.l.b16 %v169
    %v254 = vunpack.c.l.b16 %v170
    %v255 = vunpack.c.l.b16 %v171
    %v256 = vunpack.c.l.b16 %v172
    %v257 = vunpack.c.l.b16 %v173
    %v258 = vunpack.c.l.b16 %v174
    %v259 = vunpack.c.l.b16 %v175
    %v260 = vunpack.c.l.b16 %v176
    %v261 = vunpack.c.l.b16 %v177
    %v262 = vpack.c.b16 %v247, %v246
    %v263 = vpack.c.b16 %v249, %v248
    %v264 = vpack.c.b16 %v251, %v250
    %v265 = vpack.c.b16 %v253, %v252
    %v266 = vpack.c.b16 %v255, %v254
    %v267 = vpack.c.b16 %v257, %v256
    %v268 = vpack.c.b16 %v259, %v258
    %v269 = vpack.c.b16 %v261, %v260
    %278 = vmatpush.bf16.msra.mxu0 %v269
    %279 = vmatpush.bf16.msra.mxu0 %v268
    %280 = vmatpush.bf16.msra.mxu0 %v267
    %281 = vmatpush.bf16.msra.mxu0 %v266
    %282 = vmatpush.bf16.msra.mxu0 %v265
    %283 = vmatpush.bf16.msra.mxu0 %v264
    %284 = vmatpush.bf16.msra.mxu0 %v263
    %285 = vmatpush.bf16.msra.mxu0 %v262
    %286 = vmatmul.bf16.gmra.mxu0 %v214
    %v287 = vpop.f32.mrf.mxu0
    %v288 = vadd.f32 %v180, %v287
    %v289 = vpop.f32.mrf.mxu0
    %v290 = vadd.f32 %v180, %v289
    %291 = vmatmul.bf16.gmra.mxu0 %v215
    %v292 = vpop.f32.mrf.mxu0
    %v293 = vadd.f32 %v180, %v292
    %v294 = vpop.f32.mrf.mxu0
    %v295 = vadd.f32 %v180, %v294
    %296 = vmatmul.bf16.gmra.mxu0 %v216
    %v297 = vpop.f32.mrf.mxu0
    %v298 = vadd.f32 %v180, %v297
    %v299 = vpop.f32.mrf.mxu0
    %v300 = vadd.f32 %v180, %v299
    %301 = vmatmul.bf16.gmra.mxu0 %v217
    %v302 = vpop.f32.mrf.mxu0
    %v303 = vadd.f32 %v180, %v302
    %v304 = vpop.f32.mrf.mxu0
    %v305 = vadd.f32 %v180, %v304
    %306 = vmatmul.bf16.gmra.mxu0 %v218
    %v307 = vpop.f32.mrf.mxu0
    %v308 = vadd.f32 %v180, %v307
    %v309 = vpop.f32.mrf.mxu0
    %v310 = vadd.f32 %v180, %v309
    %311 = vmatmul.bf16.gmra.mxu0 %v219
    %v312 = vpop.f32.mrf.mxu0
    %v313 = vadd.f32 %v180, %v312
    %v314 = vpop.f32.mrf.mxu0
    %v315 = vadd.f32 %v180, %v314
    %316 = vmatmul.bf16.gmra.mxu0 %v220
    %v317 = vpop.f32.mrf.mxu0
    %v318 = vadd.f32 %v180, %v317
    %v319 = vpop.f32.mrf.mxu0
    %v320 = vadd.f32 %v180, %v319
    %321 = vmatmul.bf16.gmra.mxu0 %v221
    %v322 = vpop.f32.mrf.mxu0
    %v323 = vadd.f32 %v180, %v322
    %v324 = vpop.f32.mrf.mxu0
    %v325 = vadd.f32 %v180, %v324
    %326 = vdwg.mxu0
    %v327 = vpack.c.bf16 %v290, %v288
    %v328 = vpack.c.bf16 %v295, %v293
    %v329 = vpack.c.bf16 %v300, %v298
    %v330 = vpack.c.bf16 %v305, %v303
    %v331 = vpack.c.bf16 %v310, %v308
    %v332 = vpack.c.bf16 %v315, %v313
    %v333 = vpack.c.bf16 %v320, %v318
    %v334 = vpack.c.bf16 %v325, %v323
    %v351 = vunpack.c.l.b16 %v130
    %v352 = vunpack.c.l.b16 %v131
    %v353 = vunpack.c.l.b16 %v132
    %v354 = vunpack.c.l.b16 %v133
    %v355 = vunpack.c.l.b16 %v134
    %v356 = vunpack.c.l.b16 %v135
    %v357 = vunpack.c.l.b16 %v136
    %v358 = vunpack.c.l.b16 %v137
    %v359 = vunpack.c.l.b16 %v138
    %v360 = vunpack.c.l.b16 %v139
    %v361 = vunpack.c.l.b16 %v140
    %v362 = vunpack.c.l.b16 %v141
    %v363 = vunpack.c.l.b16 %v142
    %v364 = vunpack.c.l.b16 %v143
    %v365 = vunpack.c.l.b16 %v144
    %v366 = vunpack.c.l.b16 %v145
    %v367 = vpack.c.b16 %v352, %v351
    %v368 = vpack.c.b16 %v354, %v353
    %v369 = vpack.c.b16 %v356, %v355
    %v370 = vpack.c.b16 %v358, %v357
    %v371 = vpack.c.b16 %v360, %v359
    %v372 = vpack.c.b16 %v362, %v361
    %v373 = vpack.c.b16 %v364, %v363
    %v374 = vpack.c.b16 %v366, %v365
    %383 = vmatpush.bf16.msra.mxu0 %v334
    %384 = vmatpush.bf16.msra.mxu0 %v333
    %385 = vmatpush.bf16.msra.mxu0 %v332
    %386 = vmatpush.bf16.msra.mxu0 %v331
    %387 = vmatpush.bf16.msra.mxu0 %v330
    %388 = vmatpush.bf16.msra.mxu0 %v329
    %389 = vmatpush.bf16.msra.mxu0 %v328
    %390 = vmatpush.bf16.msra.mxu0 %v327
    %391 = vmatmul.bf16.gmra.mxu0 %v367
    %v392 = vpop.f32.mrf.mxu0
    %v393 = vadd.f32 0.0, %v392
    %v394 = vpop.f32.mrf.mxu0
    %v395 = vadd.f32 0.0, %v394
    %396 = vmatmul.bf16.gmra.mxu0 %v368
    %v397 = vpop.f32.mrf.mxu0
    %v398 = vadd.f32 0.0, %v397
    %v399 = vpop.f32.mrf.mxu0
    %v400 = vadd.f32 0.0, %v399
    %401 = vmatmul.bf16.gmra.mxu0 %v369
    %v402 = vpop.f32.mrf.mxu0
    %v403 = vadd.f32 0.0, %v402
    %v404 = vpop.f32.mrf.mxu0
    %v405 = vadd.f32 0.0, %v404
    %406 = vmatmul.bf16.gmra.mxu0 %v370
    %v407 = vpop.f32.mrf.mxu0
    %v408 = vadd.f32 0.0, %v407
    %v409 = vpop.f32.mrf.mxu0
    %v410 = vadd.f32 0.0, %v409
    %411 = vmatmul.bf16.gmra.mxu0 %v371
    %v412 = vpop.f32.mrf.mxu0
    %v413 = vadd.f32 0.0, %v412
    %v414 = vpop.f32.mrf.mxu0
    %v415 = vadd.f32 0.0, %v414
    %416 = vmatmul.bf16.gmra.mxu0 %v372
    %v417 = vpop.f32.mrf.mxu0
    %v418 = vadd.f32 0.0, %v417
    %v419 = vpop.f32.mrf.mxu0
    %v420 = vadd.f32 0.0, %v419
    %421 = vmatmul.bf16.gmra.mxu0 %v373
    %v422 = vpop.f32.mrf.mxu0
    %v423 = vadd.f32 0.0, %v422
    %v424 = vpop.f32.mrf.mxu0
    %v425 = vadd.f32 0.0, %v424
    %426 = vmatmul.bf16.gmra.mxu0 %v374
    %v427 = vpop.f32.mrf.mxu0
    %v428 = vadd.f32 0.0, %v427
    %v429 = vpop.f32.mrf.mxu0
    %v430 = vadd.f32 0.0, %v429
    %431 = vdwg.mxu0
    %v432 = vpack.c.bf16 %v395, %v393
    %v433 = vpack.c.bf16 %v400, %v398
    %v434 = vpack.c.bf16 %v405, %v403
    %v435 = vpack.c.bf16 %v410, %v408
    %v436 = vpack.c.bf16 %v415, %v413
    %v437 = vpack.c.bf16 %v420, %v418
    %v438 = vpack.c.bf16 %v425, %v423
    %v439 = vpack.c.bf16 %v430, %v428
    %v440 = vld [vmem:[#allocation8] sm:$0xf]
    %v441 = vld [vmem:[#allocation8 + $0x4] sm:$0xf]
    %v442 = vld [vmem:[#allocation8 + $0x8] sm:$0xf]
    %v443 = vld [vmem:[#allocation8 + $0xc] sm:$0xf]
    %v444 = vld [vmem:[#allocation8 + $0x10] sm:$0xf]
    %v445 = vld [vmem:[#allocation8 + $0x14] sm:$0xf]
    %v446 = vld [vmem:[#allocation8 + $0x18] sm:$0xf]
    %v447 = vld [vmem:[#allocation8 + $0x1c] sm:$0xf]
    %v448 = vld [vmem:[#allocation8 + $0x20] sm:$0xf]
    %v449 = vld [vmem:[#allocation8 + $0x24] sm:$0xf]
    %v450 = vld [vmem:[#allocation8 + $0x28] sm:$0xf]
    %v451 = vld [vmem:[#allocation8 + $0x2c] sm:$0xf]
    %v452 = vld [vmem:[#allocation8 + $0x30] sm:$0xf]
    %v453 = vld [vmem:[#allocation8 + $0x34] sm:$0xf]
    %v454 = vld [vmem:[#allocation8 + $0x38] sm:$0xf]
    %v455 = vld [vmem:[#allocation8 + $0x3c] sm:$0xf]
    %v456 = vld [vmem:[%s5] sm:$0x1]
    %v458 = vperm.slane %v456, 0
    %v476 = vunpack.c.l.b16 %v440
    %v477 = vunpack.c.l.b16 %v441
    %v478 = vunpack.c.l.b16 %v442
    %v479 = vunpack.c.l.b16 %v443
    %v480 = vunpack.c.l.b16 %v444
    %v481 = vunpack.c.l.b16 %v445
    %v482 = vunpack.c.l.b16 %v446
    %v483 = vunpack.c.l.b16 %v447
    %v484 = vunpack.c.l.b16 %v448
    %v485 = vunpack.c.l.b16 %v449
    %v486 = vunpack.c.l.b16 %v450
    %v487 = vunpack.c.l.b16 %v451
    %v488 = vunpack.c.l.b16 %v452
    %v489 = vunpack.c.l.b16 %v453
    %v490 = vunpack.c.l.b16 %v454
    %v491 = vunpack.c.l.b16 %v455
    %v492 = vpack.c.b16 %v477, %v476
    %v493 = vpack.c.b16 %v479, %v478
    %v494 = vpack.c.b16 %v481, %v480
    %v495 = vpack.c.b16 %v483, %v482
    %v496 = vpack.c.b16 %v485, %v484
    %v497 = vpack.c.b16 %v487, %v486
    %v498 = vpack.c.b16 %v489, %v488
    %v499 = vpack.c.b16 %v491, %v490
    %508 = vmatpush.bf16.msra.mxu0 %v499
    %509 = vmatpush.bf16.msra.mxu0 %v498
    %510 = vmatpush.bf16.msra.mxu0 %v497
    %511 = vmatpush.bf16.msra.mxu0 %v496
    %512 = vmatpush.bf16.msra.mxu0 %v495
    %513 = vmatpush.bf16.msra.mxu0 %v494
    %514 = vmatpush.bf16.msra.mxu0 %v493
    %515 = vmatpush.bf16.msra.mxu0 %v492
    %516 = vmatmul.bf16.gmra.mxu0 %v432
    %v517 = vpop.f32.mrf.mxu0
    %v518 = vadd.f32 %v458, %v517
    %v519 = vpop.f32.mrf.mxu0
    %v520 = vadd.f32 %v458, %v519
    %521 = vmatmul.bf16.gmra.mxu0 %v433
    %v522 = vpop.f32.mrf.mxu0
    %v523 = vadd.f32 %v458, %v522
    %v524 = vpop.f32.mrf.mxu0
    %v525 = vadd.f32 %v458, %v524
    %526 = vmatmul.bf16.gmra.mxu0 %v434
    %v527 = vpop.f32.mrf.mxu0
    %v528 = vadd.f32 %v458, %v527
    %v529 = vpop.f32.mrf.mxu0
    %v530 = vadd.f32 %v458, %v529
    %531 = vmatmul.bf16.gmra.mxu0 %v435
    %v532 = vpop.f32.mrf.mxu0
    %v533 = vadd.f32 %v458, %v532
    %v534 = vpop.f32.mrf.mxu0
    %v535 = vadd.f32 %v458, %v534
    %536 = vmatmul.bf16.gmra.mxu0 %v436
    %v537 = vpop.f32.mrf.mxu0
    %v538 = vadd.f32 %v458, %v537
    %v539 = vpop.f32.mrf.mxu0
    %v540 = vadd.f32 %v458, %v539
    %541 = vmatmul.bf16.gmra.mxu0 %v437
    %v542 = vpop.f32.mrf.mxu0
    %v543 = vadd.f32 %v458, %v542
    %v544 = vpop.f32.mrf.mxu0
    %v545 = vadd.f32 %v458, %v544
    %546 = vmatmul.bf16.gmra.mxu0 %v438
    %v547 = vpop.f32.mrf.mxu0
    %v548 = vadd.f32 %v458, %v547
    %v549 = vpop.f32.mrf.mxu0
    %v550 = vadd.f32 %v458, %v549
    %551 = vmatmul.bf16.gmra.mxu0 %v439
    %v552 = vpop.f32.mrf.mxu0
    %v553 = vadd.f32 %v458, %v552
    %v554 = vpop.f32.mrf.mxu0
    %v555 = vadd.f32 %v458, %v554
    %556 = vdwg.mxu0
    %v557 = vpack.c.bf16 %v520, %v518
    %v558 = vpack.c.bf16 %v525, %v523
    %v559 = vpack.c.bf16 %v530, %v528
    %v560 = vpack.c.bf16 %v535, %v533
    %v561 = vpack.c.bf16 %v540, %v538
    %v562 = vpack.c.bf16 %v545, %v543
    %v563 = vpack.c.bf16 %v550, %v548
    %v564 = vpack.c.bf16 %v555, %v553
    %565 = vmatpush.bf16.msra.mxu0 %v564
    %566 = vmatpush.bf16.msra.mxu0 %v563
    %567 = vmatpush.bf16.msra.mxu0 %v562
    %568 = vmatpush.bf16.msra.mxu0 %v561
    %569 = vmatpush.bf16.msra.mxu0 %v560
    %570 = vmatpush.bf16.msra.mxu0 %v559
    %571 = vmatpush.bf16.msra.mxu0 %v558
    %572 = vmatpush.bf16.msra.mxu0 %v557
    %573 = vmatmul.bf16.gmra.mxu0 %v367
    %v574 = vpop.f32.mrf.mxu0
    %v575 = vadd.f32 0.0, %v574
    %v576 = vpop.f32.mrf.mxu0
    %v577 = vadd.f32 0.0, %v576
    %578 = vmatmul.bf16.gmra.mxu0 %v368
    %v579 = vpop.f32.mrf.mxu0
    %v580 = vadd.f32 0.0, %v579
    %v581 = vpop.f32.mrf.mxu0
    %v582 = vadd.f32 0.0, %v581
    %583 = vmatmul.bf16.gmra.mxu0 %v369
    %v584 = vpop.f32.mrf.mxu0
    %v585 = vadd.f32 0.0, %v584
    %v586 = vpop.f32.mrf.mxu0
    %v587 = vadd.f32 0.0, %v586
    %588 = vmatmul.bf16.gmra.mxu0 %v370
    %v589 = vpop.f32.mrf.mxu0
    %v590 = vadd.f32 0.0, %v589
    %v591 = vpop.f32.mrf.mxu0
    %v592 = vadd.f32 0.0, %v591
    %593 = vmatmul.bf16.gmra.mxu0 %v371
    %v594 = vpop.f32.mrf.mxu0
    %v595 = vadd.f32 0.0, %v594
    %v596 = vpop.f32.mrf.mxu0
    %v597 = vadd.f32 0.0, %v596
    %598 = vmatmul.bf16.gmra.mxu0 %v372
    %v599 = vpop.f32.mrf.mxu0
    %v600 = vadd.f32 0.0, %v599
    %v601 = vpop.f32.mrf.mxu0
    %v602 = vadd.f32 0.0, %v601
    %603 = vmatmul.bf16.gmra.mxu0 %v373
    %v604 = vpop.f32.mrf.mxu0
    %v605 = vadd.f32 0.0, %v604
    %v606 = vpop.f32.mrf.mxu0
    %v607 = vadd.f32 0.0, %v606
    %608 = vmatmul.bf16.gmra.mxu0 %v374
    %v609 = vpop.f32.mrf.mxu0
    %v610 = vadd.f32 0.0, %v609
    %v611 = vpop.f32.mrf.mxu0
    %v612 = vadd.f32 0.0, %v611
    %613 = vdwg.mxu0
    %v614 = vpack.c.bf16 %v577, %v575
    %v615 = vpack.c.bf16 %v582, %v580
    %v616 = vpack.c.bf16 %v587, %v585
    %v617 = vpack.c.bf16 %v592, %v590
    %v618 = vpack.c.bf16 %v597, %v595
    %v619 = vpack.c.bf16 %v602, %v600
    %v620 = vpack.c.bf16 %v607, %v605
    %v621 = vpack.c.bf16 %v612, %v610
    %v622 = vld [vmem:[#allocation10] sm:$0xf]
    %v623 = vld [vmem:[#allocation10 + $0x4] sm:$0xf]
    %v624 = vld [vmem:[#allocation10 + $0x8] sm:$0xf]
    %v625 = vld [vmem:[#allocation10 + $0xc] sm:$0xf]
    %v626 = vld [vmem:[#allocation10 + $0x10] sm:$0xf]
    %v627 = vld [vmem:[#allocation10 + $0x14] sm:$0xf]
    %v628 = vld [vmem:[#allocation10 + $0x18] sm:$0xf]
    %v629 = vld [vmem:[#allocation10 + $0x1c] sm:$0xf]
    %v630 = vld [vmem:[#allocation10 + $0x20] sm:$0xf]
    %v631 = vld [vmem:[#allocation10 + $0x24] sm:$0xf]
    %v632 = vld [vmem:[#allocation10 + $0x28] sm:$0xf]
    %v633 = vld [vmem:[#allocation10 + $0x2c] sm:$0xf]
    %v634 = vld [vmem:[#allocation10 + $0x30] sm:$0xf]
    %v635 = vld [vmem:[#allocation10 + $0x34] sm:$0xf]
    %v636 = vld [vmem:[#allocation10 + $0x38] sm:$0xf]
    %v637 = vld [vmem:[#allocation10 + $0x3c] sm:$0xf]
    %v638 = vld [vmem:[%s7] sm:$0x1]
    %v640 = vperm.slane %v638, 0
    %v658 = vunpack.c.l.b16 %v622
    %v659 = vunpack.c.l.b16 %v623
    %v660 = vunpack.c.l.b16 %v624
    %v661 = vunpack.c.l.b16 %v625
    %v662 = vunpack.c.l.b16 %v626
    %v663 = vunpack.c.l.b16 %v627
    %v664 = vunpack.c.l.b16 %v628
    %v665 = vunpack.c.l.b16 %v629
    %v666 = vunpack.c.l.b16 %v630
    %v667 = vunpack.c.l.b16 %v631
    %v668 = vunpack.c.l.b16 %v632
    %v669 = vunpack.c.l.b16 %v633
    %v670 = vunpack.c.l.b16 %v634
    %v671 = vunpack.c.l.b16 %v635
    %v672 = vunpack.c.l.b16 %v636
    %v673 = vunpack.c.l.b16 %v637
    %v674 = vpack.c.b16 %v659, %v658
    %v675 = vpack.c.b16 %v661, %v660
    %v676 = vpack.c.b16 %v663, %v662
    %v677 = vpack.c.b16 %v665, %v664
    %v678 = vpack.c.b16 %v667, %v666
    %v679 = vpack.c.b16 %v669, %v668
    %v680 = vpack.c.b16 %v671, %v670
    %v681 = vpack.c.b16 %v673, %v672
    %690 = vmatpush.bf16.msra.mxu0 %v681
    %691 = vmatpush.bf16.msra.mxu0 %v680
    %692 = vmatpush.bf16.msra.mxu0 %v679
    %693 = vmatpush.bf16.msra.mxu0 %v678
    %694 = vmatpush.bf16.msra.mxu0 %v677
    %695 = vmatpush.bf16.msra.mxu0 %v676
    %696 = vmatpush.bf16.msra.mxu0 %v675
    %697 = vmatpush.bf16.msra.mxu0 %v674
    %698 = vmatmul.bf16.gmra.mxu0 %v614
    %v699 = vpop.f32.mrf.mxu0
    %v700 = vadd.f32 %v640, %v699
    %v701 = vpop.f32.mrf.mxu0
    %v702 = vadd.f32 %v640, %v701
    %703 = vmatmul.bf16.gmra.mxu0 %v615
    %v704 = vpop.f32.mrf.mxu0
    %v705 = vadd.f32 %v640, %v704
    %v706 = vpop.f32.mrf.mxu0
    %v707 = vadd.f32 %v640, %v706
    %708 = vmatmul.bf16.gmra.mxu0 %v616
    %v709 = vpop.f32.mrf.mxu0
    %v710 = vadd.f32 %v640, %v709
    %v711 = vpop.f32.mrf.mxu0
    %v712 = vadd.f32 %v640, %v711
    %713 = vmatmul.bf16.gmra.mxu0 %v617
    %v714 = vpop.f32.mrf.mxu0
    %v715 = vadd.f32 %v640, %v714
    %v716 = vpop.f32.mrf.mxu0
    %v717 = vadd.f32 %v640, %v716
    %718 = vmatmul.bf16.gmra.mxu0 %v618
    %v719 = vpop.f32.mrf.mxu0
    %v720 = vadd.f32 %v640, %v719
    %v721 = vpop.f32.mrf.mxu0
    %v722 = vadd.f32 %v640, %v721
    %723 = vmatmul.bf16.gmra.mxu0 %v619
    %v724 = vpop.f32.mrf.mxu0
    %v725 = vadd.f32 %v640, %v724
    %v726 = vpop.f32.mrf.mxu0
    %v727 = vadd.f32 %v640, %v726
    %728 = vmatmul.bf16.gmra.mxu0 %v620
    %v729 = vpop.f32.mrf.mxu0
    %v730 = vadd.f32 %v640, %v729
    %v731 = vpop.f32.mrf.mxu0
    %v732 = vadd.f32 %v640, %v731
    %733 = vmatmul.bf16.gmra.mxu0 %v621
    %v734 = vpop.f32.mrf.mxu0
    %v735 = vadd.f32 %v640, %v734
    %v736 = vpop.f32.mrf.mxu0
    %v737 = vadd.f32 %v640, %v736
    %738 = vdwg.mxu0
    %v739 = vpack.c.bf16 %v702, %v700
    %v740 = vpack.c.bf16 %v707, %v705
    %v741 = vpack.c.bf16 %v712, %v710
    %v742 = vpack.c.bf16 %v717, %v715
    %v743 = vpack.c.bf16 %v722, %v720
    %v744 = vpack.c.bf16 %v727, %v725
    %v745 = vpack.c.bf16 %v732, %v730
    %v746 = vpack.c.bf16 %v737, %v735
    %747 = vmatpush.bf16.msra.mxu0 %v746
    %748 = vmatpush.bf16.msra.mxu0 %v745
    %749 = vmatpush.bf16.msra.mxu0 %v744
    %750 = vmatpush.bf16.msra.mxu0 %v743
    %751 = vmatpush.bf16.msra.mxu0 %v742
    %752 = vmatpush.bf16.msra.mxu0 %v741
    %753 = vmatpush.bf16.msra.mxu0 %v740
    %754 = vmatpush.bf16.msra.mxu0 %v739
    %755 = vmatmul.bf16.gmra.mxu0 %v367
    %v756 = vpop.f32.mrf.mxu0
    %v757 = vadd.f32 0.0, %v756
    %v758 = vpop.f32.mrf.mxu0
    %v759 = vadd.f32 0.0, %v758
    %760 = vmatmul.bf16.gmra.mxu0 %v368
    %v761 = vpop.f32.mrf.mxu0
    %v762 = vadd.f32 0.0, %v761
    %v763 = vpop.f32.mrf.mxu0
    %v764 = vadd.f32 0.0, %v763
    %765 = vmatmul.bf16.gmra.mxu0 %v369
    %v766 = vpop.f32.mrf.mxu0
    %v767 = vadd.f32 0.0, %v766
    %v768 = vpop.f32.mrf.mxu0
    %v769 = vadd.f32 0.0, %v768
    %770 = vmatmul.bf16.gmra.mxu0 %v370
    %v771 = vpop.f32.mrf.mxu0
    %v772 = vadd.f32 0.0, %v771
    %v773 = vpop.f32.mrf.mxu0
    %v774 = vadd.f32 0.0, %v773
    %775 = vmatmul.bf16.gmra.mxu0 %v371
    %v776 = vpop.f32.mrf.mxu0
    %v777 = vadd.f32 0.0, %v776
    %v778 = vpop.f32.mrf.mxu0
    %v779 = vadd.f32 0.0, %v778
    %780 = vmatmul.bf16.gmra.mxu0 %v372
    %v781 = vpop.f32.mrf.mxu0
    %v782 = vadd.f32 0.0, %v781
    %v783 = vpop.f32.mrf.mxu0
    %v784 = vadd.f32 0.0, %v783
    %785 = vmatmul.bf16.gmra.mxu0 %v373
    %v786 = vpop.f32.mrf.mxu0
    %v787 = vadd.f32 0.0, %v786
    %v788 = vpop.f32.mrf.mxu0
    %v789 = vadd.f32 0.0, %v788
    %790 = vmatmul.bf16.gmra.mxu0 %v374
    %v791 = vpop.f32.mrf.mxu0
    %v792 = vadd.f32 0.0, %v791
    %v793 = vpop.f32.mrf.mxu0
    %v794 = vadd.f32 0.0, %v793
    %795 = vdwg.mxu0
    %v796 = vpack.c.bf16 %v759, %v757
    %v797 = vpack.c.bf16 %v764, %v762
    %v798 = vpack.c.bf16 %v769, %v767
    %v799 = vpack.c.bf16 %v774, %v772
    %v800 = vpack.c.bf16 %v779, %v777
    %v801 = vpack.c.bf16 %v784, %v782
    %v802 = vpack.c.bf16 %v789, %v787
    %v803 = vpack.c.bf16 %v794, %v792
    %v804 = vld [vmem:[#allocation11] sm:$0xf]
    %v805 = vld [vmem:[#allocation11 + $0x4] sm:$0xf]
    %v806 = vld [vmem:[#allocation11 + $0x8] sm:$0xf]
    %v807 = vld [vmem:[#allocation11 + $0xc] sm:$0xf]
    %v808 = vld [vmem:[#allocation11 + $0x10] sm:$0xf]
    %v809 = vld [vmem:[#allocation11 + $0x14] sm:$0xf]
    %v810 = vld [vmem:[#allocation11 + $0x18] sm:$0xf]
    %v811 = vld [vmem:[#allocation11 + $0x1c] sm:$0xf]
    %v812 = vld [vmem:[#allocation11 + $0x20] sm:$0xf]
    %v813 = vld [vmem:[#allocation11 + $0x24] sm:$0xf]
    %v814 = vld [vmem:[#allocation11 + $0x28] sm:$0xf]
    %v815 = vld [vmem:[#allocation11 + $0x2c] sm:$0xf]
    %v816 = vld [vmem:[#allocation11 + $0x30] sm:$0xf]
    %v817 = vld [vmem:[#allocation11 + $0x34] sm:$0xf]
    %v818 = vld [vmem:[#allocation11 + $0x38] sm:$0xf]
    %v819 = vld [vmem:[#allocation11 + $0x3c] sm:$0xf]
    %v820 = vld [vmem:[%s9] sm:$0x1]
    %v822 = vperm.slane %v820, 0
    %v840 = vunpack.c.l.b16 %v804
    %v841 = vunpack.c.l.b16 %v805
    %v842 = vunpack.c.l.b16 %v806
    %v843 = vunpack.c.l.b16 %v807
    %v844 = vunpack.c.l.b16 %v808
    %v845 = vunpack.c.l.b16 %v809
    %v846 = vunpack.c.l.b16 %v810
    %v847 = vunpack.c.l.b16 %v811
    %v848 = vunpack.c.l.b16 %v812
    %v849 = vunpack.c.l.b16 %v813
    %v850 = vunpack.c.l.b16 %v814
    %v851 = vunpack.c.l.b16 %v815
    %v852 = vunpack.c.l.b16 %v816
    %v853 = vunpack.c.l.b16 %v817
    %v854 = vunpack.c.l.b16 %v818
    %v855 = vunpack.c.l.b16 %v819
    %v856 = vpack.c.b16 %v841, %v840
    %v857 = vpack.c.b16 %v843, %v842
    %v858 = vpack.c.b16 %v845, %v844
    %v859 = vpack.c.b16 %v847, %v846
    %v860 = vpack.c.b16 %v849, %v848
    %v861 = vpack.c.b16 %v851, %v850
    %v862 = vpack.c.b16 %v853, %v852
    %v863 = vpack.c.b16 %v855, %v854
    %872 = vmatpush.bf16.msra.mxu0 %v863
    %873 = vmatpush.bf16.msra.mxu0 %v862
    %874 = vmatpush.bf16.msra.mxu0 %v861
    %875 = vmatpush.bf16.msra.mxu0 %v860
    %876 = vmatpush.bf16.msra.mxu0 %v859
    %877 = vmatpush.bf16.msra.mxu0 %v858
    %878 = vmatpush.bf16.msra.mxu0 %v857
    %879 = vmatpush.bf16.msra.mxu0 %v856
    %880 = vmatmul.bf16.gmra.mxu0 %v796
    %v881 = vpop.f32.mrf.mxu0
    %v882 = vadd.f32 %v822, %v881
    %v883 = vpop.f32.mrf.mxu0
    %v884 = vadd.f32 %v822, %v883
    %885 = vmatmul.bf16.gmra.mxu0 %v797
    %v886 = vpop.f32.mrf.mxu0
    %v887 = vadd.f32 %v822, %v886
    %v888 = vpop.f32.mrf.mxu0
    %v889 = vadd.f32 %v822, %v888
    %890 = vmatmul.bf16.gmra.mxu0 %v798
    %v891 = vpop.f32.mrf.mxu0
    %v892 = vadd.f32 %v822, %v891
    %v893 = vpop.f32.mrf.mxu0
    %v894 = vadd.f32 %v822, %v893
    %895 = vmatmul.bf16.gmra.mxu0 %v799
    %v896 = vpop.f32.mrf.mxu0
    %v897 = vadd.f32 %v822, %v896
    %v898 = vpop.f32.mrf.mxu0
    %v899 = vadd.f32 %v822, %v898
    %900 = vmatmul.bf16.gmra.mxu0 %v800
    %v901 = vpop.f32.mrf.mxu0
    %v902 = vadd.f32 %v822, %v901
    %v903 = vpop.f32.mrf.mxu0
    %v904 = vadd.f32 %v822, %v903
    %905 = vmatmul.bf16.gmra.mxu0 %v801
    %v906 = vpop.f32.mrf.mxu0
    %v907 = vadd.f32 %v822, %v906
    %v908 = vpop.f32.mrf.mxu0
    %v909 = vadd.f32 %v822, %v908
    %910 = vmatmul.bf16.gmra.mxu0 %v802
    %v911 = vpop.f32.mrf.mxu0
    %v912 = vadd.f32 %v822, %v911
    %v913 = vpop.f32.mrf.mxu0
    %v914 = vadd.f32 %v822, %v913
    %915 = vmatmul.bf16.gmra.mxu0 %v803
    %v916 = vpop.f32.mrf.mxu0
    %v917 = vadd.f32 %v822, %v916
    %v918 = vpop.f32.mrf.mxu0
    %v919 = vadd.f32 %v822, %v918
    %920 = vdwg.mxu0
    %v921 = vpack.c.bf16 %v884, %v882
    %v922 = vpack.c.bf16 %v889, %v887
    %v923 = vpack.c.bf16 %v894, %v892
    %v924 = vpack.c.bf16 %v899, %v897
    %v925 = vpack.c.bf16 %v904, %v902
    %v926 = vpack.c.bf16 %v909, %v907
    %v927 = vpack.c.bf16 %v914, %v912
    %v928 = vpack.c.bf16 %v919, %v917
    %929 = vmatpush.bf16.msra.mxu0 %v928
    %930 = vmatpush.bf16.msra.mxu0 %v927
    %931 = vmatpush.bf16.msra.mxu0 %v926
    %932 = vmatpush.bf16.msra.mxu0 %v925
    %933 = vmatpush.bf16.msra.mxu0 %v924
    %934 = vmatpush.bf16.msra.mxu0 %v923
    %935 = vmatpush.bf16.msra.mxu0 %v922
    %936 = vmatpush.bf16.msra.mxu0 %v921
    %937 = vmatmul.bf16.gmra.mxu0 %v367
    %v938 = vpop.f32.mrf.mxu0
    %v939 = vadd.f32 0.0, %v938
    %v940 = vpop.f32.mrf.mxu0
    %v941 = vadd.f32 0.0, %v940
    %942 = vmatmul.bf16.gmra.mxu0 %v368
    %v943 = vpop.f32.mrf.mxu0
    %v944 = vadd.f32 0.0, %v943
    %v945 = vpop.f32.mrf.mxu0
    %v946 = vadd.f32 0.0, %v945
    %947 = vmatmul.bf16.gmra.mxu0 %v369
    %v948 = vpop.f32.mrf.mxu0
    %v949 = vadd.f32 0.0, %v948
    %v950 = vpop.f32.mrf.mxu0
    %v951 = vadd.f32 0.0, %v950
    %952 = vmatmul.bf16.gmra.mxu0 %v370
    %v953 = vpop.f32.mrf.mxu0
    %v954 = vadd.f32 0.0, %v953
    %v955 = vpop.f32.mrf.mxu0
    %v956 = vadd.f32 0.0, %v955
    %957 = vmatmul.bf16.gmra.mxu0 %v371
    %v958 = vpop.f32.mrf.mxu0
    %v959 = vadd.f32 0.0, %v958
    %v960 = vpop.f32.mrf.mxu0
    %v961 = vadd.f32 0.0, %v960
    %962 = vmatmul.bf16.gmra.mxu0 %v372
    %v963 = vpop.f32.mrf.mxu0
    %v964 = vadd.f32 0.0, %v963
    %v965 = vpop.f32.mrf.mxu0
    %v966 = vadd.f32 0.0, %v965
    %967 = vmatmul.bf16.gmra.mxu0 %v373
    %v968 = vpop.f32.mrf.mxu0
    %v969 = vadd.f32 0.0, %v968
    %v970 = vpop.f32.mrf.mxu0
    %v971 = vadd.f32 0.0, %v970
    %972 = vmatmul.bf16.gmra.mxu0 %v374
    %v973 = vpop.f32.mrf.mxu0
    %v974 = vadd.f32 0.0, %v973
    %v975 = vpop.f32.mrf.mxu0
    %v976 = vadd.f32 0.0, %v975
    %977 = vdwg.mxu0
    %978 = vst [vmem:[#allocation13] sm:$0xff] %v939
    %979 = vst [vmem:[#allocation13 + $0x8] sm:$0xff] %v941
    %980 = vst [vmem:[#allocation13 + $0x10] sm:$0xff] %v944
    %981 = vst [vmem:[#allocation13 + $0x18] sm:$0xff] %v946
    %982 = vst [vmem:[#allocation13 + $0x20] sm:$0xff] %v949
    %983 = vst [vmem:[#allocation13 + $0x28] sm:$0xff] %v951
    %984 = vst [vmem:[#allocation13 + $0x30] sm:$0xff] %v954
    %985 = vst [vmem:[#allocation13 + $0x38] sm:$0xff] %v956
    %986 = vst [vmem:[#allocation13 + $0x40] sm:$0xff] %v959
    %987 = vst [vmem:[#allocation13 + $0x48] sm:$0xff] %v961
    %988 = vst [vmem:[#allocation13 + $0x50] sm:$0xff] %v964
    %989 = vst [vmem:[#allocation13 + $0x58] sm:$0xff] %v966
    %990 = vst [vmem:[#allocation13 + $0x60] sm:$0xff] %v969
    %991 = vst [vmem:[#allocation13 + $0x68] sm:$0xff] %v971
    %992 = vst [vmem:[#allocation13 + $0x70] sm:$0xff] %v974
    %993 = vst [vmem:[#allocation13 + $0x78] sm:$0xff] %v976
    // Predicated region
    $region66: #{tpu_custom_call.1} parent=1 // pred_check
      _
    $region67: #{tpu_custom_call.1} parent=1 // pred_check_branch
      %995 = sbr.rel (0) target = $region69
    $region68: #{tpu_custom_call.1} parent=1 // pred_region
      %997 = vsyncadd [#allocation4], 0
      %s998 = sshll.u32 [#allocation13], 4
      %s999 = int_to_ptr.vmem [resolvable:$true] %s998
      %s1000 = sshll.u32 %s10, 4
      %s1001 = int_to_ptr.hbm [resolvable:$true] %s1000
      %1006 = dma.vmem_to_hbm [thread:$0]  %s999, 2048, %s1001, [#allocation4], 128, 128, 8
    $region69: #{tpu_custom_call.1} parent=1 // pred_fallthru
      _
    // Predicated region
    $region70: #{tpu_custom_call.1} parent=1 // pred_check
      _
    $region71: #{tpu_custom_call.1} parent=1 // pred_check_branch
      %1008 = sbr.rel (0) target = $region73
    $region72: #{tpu_custom_call.1} parent=1 // pred_region
      %1010 = dma.done [#allocation4], 2048
    $region73: #{tpu_custom_call.1} parent=1 // pred_fallthru
      _
    %1011 = vsyncpa [#allocation3], 1
    %1012 = vsyncpa [#allocation6], 1
    %1013 = vsyncpa [#allocation9], 1
    %1014 = vsyncpa [#allocation12], 1
    %1015 = vsyncpa [#allocation4], 1

</llo_original>
